<compile_context>
chip_gen: v7x
topology: tpu7x:2x2x1
jax: 0.10.0
libtpu: 0.0.40
codegen_flags: <defaults>
</compile_context>

<pallas_src>
import functools

import jax
import jax.numpy as jnp
from jax.experimental import pallas as pl
from jax.experimental.pallas import tpu as pltpu


# ------------------------------- helpers ------------------------------------

def _cdiv(a, b):
    return -(-a // b)


def _round_up(a, m):
    return ((a + m - 1) // m) * m


def _vmem_ceiling_bytes():
    """Generation-aware VMEM ceiling: per-core VMEM minus headroom for compiler
    internal scratch.  Falls back to a v7x-safe 64 MiB when unqueryable."""
    cap = 64 << 20
    try:
        cap = int(pltpu.get_tpu_info().vmem_capacity_bytes)
    except Exception:
        pass
    return max(32 << 20, cap - (16 << 20))        # v7x: ~48 MiB, v5e/v6e: ~112 MiB


def _bilinear_weights(in_size, out_size):
    """Interp matrix [out_size, in_size] matching PyTorch F.interpolate(
    mode='bilinear', align_corners=False).  Built in f32 for PyTorch parity."""
    scale = in_size / out_size
    dst = jnp.arange(out_size, dtype=jnp.float32)
    src = jnp.maximum((dst + 0.5) * scale - 0.5, 0.0)     # PyTorch clamps below at 0
    i0 = jnp.minimum(jnp.floor(src).astype(jnp.int32), in_size - 1)
    i1 = jnp.minimum(i0 + 1, in_size - 1)
    l1 = src - i0.astype(jnp.float32)
    l0 = 1.0 - l1
    oh0 = jax.nn.one_hot(i0, in_size, dtype=jnp.float32)
    oh1 = jax.nn.one_hot(i1, in_size, dtype=jnp.float32)
    return l0[:, None] * oh0 + l1[:, None] * oh1          # [out_size, in_size]


# ----------------------------- Pallas kernels -------------------------------

def _conv1x1_kernel(x_ref, w_ref, b_ref, y_ref):
    # x_ref: [1, Cin, TS]   w_ref: [Cp, Cin]   b_ref: [Cp, 1]   y_ref: [1, Cp, TS]
    # Channel-major matmul: lane axis = spatial tile -> lane-dense output stores.
    y_ref[0] = (
        jnp.dot(w_ref[...], x_ref[0], preferred_element_type=jnp.float32) + b_ref[...]
    ).astype(y_ref.dtype)


def _bilinear_kernel(y_ref, rw_ref, cwt_ref, o_ref, *, w_first, merge_lhs):
    # y_ref: [Cb, H, W]   rw_ref: [THo, H]   cwt_ref: [W, Wo]   o_ref: [Cb, THo, Wo]
    cb, hi, wi = y_ref.shape
    wo = cwt_ref.shape[1]
    rw = rw_ref[...]
    cwt = cwt_ref[...]
    odt = o_ref.dtype
    if w_first:
        # Columns first.  When H is a sublane-pack multiple, merge channels+rows into
        # one large lane-dense matmul [Cb*H, W] @ [W, Wo]; otherwise per-channel dots.
        if merge_lhs:
            t = jnp.dot(y_ref[...].reshape(cb * hi, wi), cwt,
                        preferred_element_type=jnp.float32).reshape(cb, hi, wo)
            for c in range(cb):
                o_ref[c] = jnp.dot(rw, t[c],
                                   preferred_element_type=jnp.float32).astype(odt)
        else:
            for c in range(cb):
                tc = jnp.dot(y_ref[c], cwt, preferred_element_type=jnp.float32)
                o_ref[c] = jnp.dot(rw, tc,
                                   preferred_element_type=jnp.float32).astype(odt)
    else:
        # Rows first (cheaper whenever the output-row axis is tiled): per-channel
        # [THo, H] @ [H, W] then [THo, W] @ [W, Wo].  No broadcast of rw over channels.
        for c in range(cb):
            tc = jnp.dot(rw, y_ref[c], preferred_element_type=jnp.float32)
            o_ref[c] = jnp.dot(tc, cwt,
                               preferred_element_type=jnp.float32).astype(odt)


# ------------------------------ public wrapper -------------------------------

def ssformer_sr_head(x, conv_w, conv_b, seg_size):
    """SSformerSRHead.forward: 1x1 conv then bilinear resize (align_corners=False).
    x: [N, Cin, H, W] (NCHW), conv_w: [Cout, Cin, 1, 1], conv_b: [Cout].
    Returns [N, Cout, segH, segW] (NCHW)."""
    N, Cin, H, W = map(int, x.shape)
    Cout = int(conv_w.shape[0])
    Ho, Wo = int(seg_size[0]), int(seg_size[1])
    dtype = x.dtype
    itemsize = jnp.dtype(dtype).itemsize
    HW = H * W

    vmem_ceiling = _vmem_ceiling_bytes()

    # Pad Cout to a sublane multiple so channel blocks are (8,128)-friendly.
    Cp = _round_up(Cout, 8)
    w2 = conv_w.reshape(Cout, Cin).astype(dtype)
    b2 = conv_b.reshape(Cout, 1).astype(jnp.float32)
    if Cp != Cout:
        w2 = jnp.pad(w2, ((0, Cp - Cout), (0, 0)))
        b2 = jnp.pad(b2, ((0, Cp - Cout), (0, 0)))

    # ------------------------- stage 1: 1x1 conv (channel-major matmul) -----
    x3 = x.reshape(N, Cin, HW)                    # free: NCHW is already channel-major

    # Spatial tile sized by bytes (per in+out buffer column), 128-aligned, cdiv grid.
    per_lane_bytes = (Cin + Cp) * itemsize
    target_buf = (3 << 20) if vmem_ceiling >= (80 << 20) else (3 << 19)   # 3 vs 1.5 MiB
    if HW < 128:
        TS = HW                                   # full extent (always a legal block)
    else:
        TS = max(128, (target_buf // per_lane_bytes) // 128 * 128)
        TS = min(TS, (HW // 128) * 128)
        # Keep >=4 grid steps so both v7x TensorCores stay busy and DMA overlaps compute.
        while N * _cdiv(HW, TS) < 4 and TS > 128:
            TS = max(128, (TS // 2) // 128 * 128)
    n_sp = _cdiv(HW, TS)

    conv_flops = 2 * N * Cp * Cin * HW
    conv_bytes = itemsize * (N * Cin * HW + N * Cp * HW + Cp * Cin) + 4 * Cp
    conv_vmem = (2 * itemsize * TS * (Cin + Cp)            # double-buffered in/out blocks
                 + 2 * (itemsize * Cp * Cin + 4 * Cp)      # weight / bias blocks
                 + 4 * Cp * TS)                            # f32 accumulator value

    y = pl.pallas_call(
        _conv1x1_kernel,
        out_shape=jax.ShapeDtypeStruct((N, Cp, HW), dtype),
        grid=(N, n_sp),
        in_specs=[
            pl.BlockSpec((1, Cin, TS), lambda n, s: (n, 0, s)),
            pl.BlockSpec((Cp, Cin), lambda n, s: (0, 0)),     # resident weights
            pl.BlockSpec((Cp, 1), lambda n, s: (0, 0)),       # resident bias
        ],
        out_specs=pl.BlockSpec((1, Cp, TS), lambda n, s: (n, 0, s)),
        compiler_params=pltpu.CompilerParams(
            dimension_semantics=("parallel", "parallel"),
            vmem_limit_bytes=int(min(vmem_ceiling, max(2 * conv_vmem, 16 << 20))),
        ),
        cost_estimate=pl.CostEstimate(flops=conv_flops, transcendentals=0,
                                      bytes_accessed=conv_bytes),
    )(x3, w2, b2)

    if (H, W) == (Ho, Wo):                        # PyTorch skips interpolate in this case
        out = y.reshape(N, Cp, H, W)
        return out[:, :Cout] if Cp != Cout else out

    # ------------------------- stage 2: separable bilinear ------------------
    # Interp matrices match F.interpolate(align_corners=False); bf16 operands when the
    # data is bf16 (MXU-native path), f32 otherwise for PyTorch parity.
    wdt = jnp.bfloat16 if dtype == jnp.bfloat16 else jnp.float32
    rw = _bilinear_weights(H, Ho).astype(wdt)     # [Ho, H]
    cwt = _bilinear_weights(W, Wo).T.astype(wdt)  # [W, Wo]

    yb = y.reshape(N * Cp, H, W)                  # free HBM reshape (channel-major)
    B = N * Cp

    # Pick (channel block Cb, output-row tile THo) under a generation-aware VMEM budget.
    def est(cb, tho):
        return (2 * itemsize * cb * H * W                  # y block (double-buffered)
                + 2 * itemsize * cb * tho * Wo             # out block (double-buffered)
                + 2 * 4 * (tho * H + W * Wo)               # interp-weight blocks
                + 4 * cb * (H * Wo + tho * (W + Wo)))      # f32 intermediates (upper bd)

    budget = (vmem_ceiling * 3) // 5
    Cb = min(B, 64)                               # B is a multiple of 8; caps unroll too
    THo = Ho
    while est(Cb, THo) > budget and Cb > 8:
        Cb = max(8, _round_up(Cb // 2, 8))
    while est(Cb, THo) > budget and THo > 8:
        THo = max(8, _round_up(THo // 2, 8))
    # >=4 grid steps (v7x megacore + pipelining).
    while _cdiv(B, Cb) * _cdiv(Ho, THo) < 4 and Cb > 8:
        Cb = max(8, _round_up(Cb // 2, 8))
    while _cdiv(B, Cb) * _cdiv(Ho, THo) < 4 and THo > 8:
        THo = max(8, _round_up(THo // 2, 8))
    nB, nT = _cdiv(B, Cb), _cdiv(Ho, THo)

    # Contraction order with the lower FLOP count (columns-first recomputes the column
    # interp once per output-row tile, so it only wins when nT stays small).
    flops_w = nT * H * W * Wo + Ho * H * Wo
    flops_r = Ho * W * (H + Wo)
    w_first = flops_w <= flops_r
    sub = 8 * 4 // itemsize                       # sublane pack: 8 for f32, 16 for bf16
    merge_lhs = w_first and (H % sub == 0)        # layout-free [Cb,H,W]->[Cb*H,W] merge

    bl_flops = 2 * B * min(flops_w, flops_r)
    bl_bytes = itemsize * (B * H * W + B * Ho * Wo) + 4 * (Ho * H + W * Wo)

    out = pl.pallas_call(
        functools.partial(_bilinear_kernel, w_first=w_first, merge_lhs=merge_lhs),
        out_shape=jax.ShapeDtypeStruct((B, Ho, Wo), dtype),
        grid=(nB, nT),
        in_specs=[
            pl.BlockSpec((Cb, H, W), lambda b, t: (b, 0, 0)),   # resident across t axis
            pl.BlockSpec((THo, H), lambda b, t: (t, 0)),
            pl.BlockSpec((W, Wo), lambda b, t: (0, 0)),
        ],
        out_specs=pl.BlockSpec((Cb, THo, Wo), lambda b, t: (b, t, 0)),
        compiler_params=pltpu.CompilerParams(
            dimension_semantics=("parallel", "parallel"),
            vmem_limit_bytes=int(min(vmem_ceiling,
                                     max(est(Cb, THo) + est(Cb, THo) // 2, 16 << 20))),
        ),
        cost_estimate=pl.CostEstimate(flops=bl_flops, transcendentals=0,
                                      bytes_accessed=bl_bytes),
    )(yb, rw, cwt)

    out = out.reshape(N, Cp, Ho, Wo)
    return out[:, :Cout] if Cp != Cout else out


# ----------------------------------- demo -----------------------------------

if __name__ == "__main__":
    key = jax.random.PRNGKey(0)
    k_x, k_w, k_b = jax.random.split(key, 3)

    N, Cin, H, W = 2, 4, 16, 16
    Cout = 8
    seg_size = (32, 32)

    x = jax.random.normal(k_x, (N, Cin, H, W), dtype=jnp.float32)
    bound = 1.0 / (Cin ** 0.5)     # nn.Conv2d default init range
    conv_w = jax.random.uniform(k_w, (Cout, Cin, 1, 1), jnp.float32, -bound, bound)
    conv_b = jax.random.uniform(k_b, (Cout,), jnp.float32, -bound, bound)

    def reference(x, conv_w, conv_b, seg):
        co = conv_w.shape[0]
        y = jnp.einsum("nchw,oc->nohw", x, conv_w.reshape(co, -1)) \
            + conv_b[None, :, None, None]
        if (x.shape[2], x.shape[3]) == tuple(seg):
            return y
        rw = _bilinear_weights(x.shape[2], seg[0])
        cw = _bilinear_weights(x.shape[3], seg[1])
        return jnp.einsum("oh,nchw,pw->ncop", rw, y, cw)

    # 1) main case: upsample 16x16 -> 32x32
    out = jax.block_until_ready(ssformer_sr_head(x, conv_w, conv_b, seg_size))
    assert out.shape == (N, Cout, seg_size[0], seg_size[1]), out.shape
    ref = reference(x, conv_w, conv_b, seg_size)
    assert jnp.allclose(out, ref, atol=1e-4, rtol=1e-4), \
        float(jnp.max(jnp.abs(out - ref)))

    # 2) Cout not a multiple of 8 (exercises channel padding) + equal-size early return
    Cout2 = 5
    k_w2, k_b2 = jax.random.split(k_w)
    conv_w2 = jax.random.uniform(k_w2, (Cout2, Cin, 1, 1), jnp.float32, -bound, bound)
    conv_b2 = jax.random.uniform(k_b2, (Cout2,), jnp.float32, -bound, bound)
    out2 = jax.block_until_ready(ssformer_sr_head(x, conv_w2, conv_b2, (H, W)))
    ref2 = reference(x, conv_w2, conv_b2, (H, W))
    assert out2.shape == (N, Cout2, H, W), out2.shape
    assert jnp.allclose(out2, ref2, atol=1e-4, rtol=1e-4)

    # 3) asymmetric target size (exercises the rows-first contraction / partial row tiles)
    seg3 = (24, 64)
    out3 = jax.block_until_ready(ssformer_sr_head(x, conv_w, conv_b, seg3))
    ref3 = reference(x, conv_w, conv_b, seg3)
    assert out3.shape == (N, Cout, seg3[0], seg3[1]), out3.shape
    assert jnp.allclose(out3, ref3, atol=1e-4, rtol=1e-4)

    print("KERNEL_OK")
</pallas_src>

<mosaic_0001>
module attributes {stable_mosaic.version = 11 : i64} {
  func.func @_conv1x1_kernel(%arg0: i32, %arg1: i32, %arg2: memref<1x4x128xf32, #tpu.memory_space<vmem>>, %arg3: memref<8x4xf32, #tpu.memory_space<vmem>>, %arg4: memref<8x1xf32, #tpu.memory_space<vmem>>, %arg5: memref<1x8x128xf32, #tpu.memory_space<vmem>>) attributes {dimension_semantics = [#tpu.dimension_semantics<parallel>, #tpu.dimension_semantics<parallel>], iteration_bounds = array<i64: 2, 2>, scalar_prefetch = 0 : i64, scratch_operands = 0 : i64, tpu.core_type = #tpu.core_type<tc>, window_params = [{transform_indices = @transform_0, window_bounds = array<i64: 1, 4, 128>}, {pipeline_mode = #tpu.pipeline_mode<synchronous>, transform_indices = @transform_1, window_bounds = array<i64: 8, 4>}, {pipeline_mode = #tpu.pipeline_mode<synchronous>, transform_indices = @transform_2, window_bounds = array<i64: 8, 1>}, {transform_indices = @transform_3, window_bounds = array<i64: 1, 8, 128>}]} {
    %c0 = arith.constant 0 : index
    %c0_0 = arith.constant 0 : index
    %0 = vector.load %arg3[%c0, %c0_0] : memref<8x4xf32, #tpu.memory_space<vmem>>, vector<8x4xf32>
    %c0_1 = arith.constant 0 : index
    %c0_2 = arith.constant 0 : index
    %c0_3 = arith.constant 0 : index
    %1 = vector.load %arg2[%c0_1, %c0_2, %c0_3] : memref<1x4x128xf32, #tpu.memory_space<vmem>>, vector<1x4x128xf32>
    %2 = vector.shape_cast %1 : vector<1x4x128xf32> to vector<4x128xf32>
    %cst = arith.constant dense<0.000000e+00> : vector<8x128xf32>
    %3 = tpu.matmul %0, %2, %cst {dimension_numbers = #tpu.dot_dimension_numbers<[1], [0], [0], [1], [0, 0, 1, 1], [], []>} : vector<8x4xf32>, vector<4x128xf32>, vector<8x128xf32> -> vector<8x128xf32>
    %c0_4 = arith.constant 0 : index
    %c0_5 = arith.constant 0 : index
    %4 = vector.load %arg4[%c0_4, %c0_5] : memref<8x1xf32, #tpu.memory_space<vmem>>, vector<8x1xf32>
    %5 = vector.broadcast %4 : vector<8x1xf32> to vector<8x128xf32>
    %6 = arith.addf %3, %5 : vector<8x128xf32>
    %c0_6 = arith.constant 0 : index
    %c0_7 = arith.constant 0 : index
    %c0_8 = arith.constant 0 : index
    %7 = vector.load %arg5[%c0_6, %c0_7, %c0_8] : memref<1x8x128xf32, #tpu.memory_space<vmem>>, vector<1x8x128xf32>
    %8 = vector.shape_cast %7 : vector<1x8x128xf32> to vector<8x128xf32>
    %9 = vector.shape_cast %6 : vector<8x128xf32> to vector<1x8x128xf32>
    tpu.vector_store %arg5[%c0_6, %c0_7, %c0_8], %9 {strides = array<i32>} : memref<1x8x128xf32, #tpu.memory_space<vmem>>, vector<1x8x128xf32>,
    return
  }
  func.func @transform_0(%arg0: i32, %arg1: i32) -> (i32, i32, i32) {
    %c0_i32 = arith.constant 0 : i32
    %c0_i32_0 = arith.constant 0 : i32
    return %arg0, %c0_i32, %arg1 : i32, i32, i32
  }
  func.func @transform_1(%arg0: i32, %arg1: i32) -> (i32, i32) {
    %c0_i32 = arith.constant 0 : i32
    %c0_i32_0 = arith.constant 0 : i32
    %c0_i32_1 = arith.constant 0 : i32
    return %c0_i32, %c0_i32_0 : i32, i32
  }
  func.func @transform_2(%arg0: i32, %arg1: i32) -> (i32, i32) {
    %c0_i32 = arith.constant 0 : i32
    %c0_i32_0 = arith.constant 0 : i32
    %c0_i32_1 = arith.constant 0 : i32
    return %c0_i32, %c0_i32_0 : i32, i32
  }
  func.func @transform_3(%arg0: i32, %arg1: i32) -> (i32, i32, i32) {
    %c0_i32 = arith.constant 0 : i32
    %c0_i32_0 = arith.constant 0 : i32
    return %arg0, %c0_i32, %arg1 : i32, i32, i32
  }
}

</mosaic_0001>

<llo_original>
// kernel: tpu_custom_call.1
$region0: #{tpu_custom_call.1}
  #allocation0 [shape = 'u32[]', space=smem, size = 0x4, offset = 0x4, fixed_abs, tag = 'smem constant byte address 0x4 - core index']
  #allocation1 [shape = 'u32[144,128]{1,0:T(1,128)}', space=vmem, size = 0x12000, scoped, tag = 'internal scratch']
  %s0 = inlined_call_operand.vmem [shape: f32[2,4,256], index: 0, kind: input, shape index: {}]
  %s1 = inlined_call_operand.vmem [shape: f32[8,4], index: 1, kind: input, shape index: {}]
  %s2 = inlined_call_operand.vmem [shape: f32[8,1], index: 2, kind: input, shape index: {}]
  %s3 = inlined_call_operand.hbm [shape: f32[2,8,256], index: 3, kind: output, shape index: {}]
  %s4 = sld [smem:[#allocation0]]
  $region45: #{tpu_custom_call.1} parent=0
    _
  %s6 = ssub.s32 1, %s4
  %s7 = scalar_select 0, %s6, %s4
  $region1: #{tpu_custom_call.1} parent=0
    #allocation2 [shape = 'u8[8192]{0}', space=vmem, size = 0x2000, scoped, tag = 'output window, operand 0']
    #allocation3 [shape = 's32[2]{0}', space=sflag, size = 0x8, scoped, tag = 'scoped memory for tpu_custom_call.1']
    %8 = vsyncpa [#allocation3], 0
    %s9 = scalar_lea.sflag [#allocation3], 1
    %10 = vsyncpa %s9, 0
    loop: start=0, step=1, limit=6
    $region2: #{tpu_custom_call.1} parent=1 // loop_pre_header
      _
    $region3: #{tpu_custom_call.1} parent=1 // loop_header
      %s12 = sphi 0, %s16
      %p13 = scmp.ge.s32.totalorder %s12, 6
      %s19 = sphi 0, %s31
      %s20 = sphi 0, %s27
      %s21 = sphi 0, %s19
      %s22 = sphi 0, %s20
      %s23 = sphi 0, %s21
      %s24 = sphi 0, %s22
      %s36 = sphi 0, %s38
      %s39 = sphi 0, %s36
      %s40 = sphi 0, %s39
      %s56 = sphi 0, %s40
      %s60 = sphi 0, %s60
      %s62 = sphi 0, %s60
      %s63 = sphi 0, %s62
      %s77 = sphi 0, %s63
      %s81 = sphi 0, %s81
      %s83 = sphi 0, %s81
      %s84 = sphi 0, %s83
      %s98 = sphi 0, %s84
      %s106 = sphi 0, %s108
      %s109 = sphi 0, %s106
      %s110 = sphi 0, %s109
      %s126 = sphi 0, %s110
    $region4: #{tpu_custom_call.1} parent=1 // loop_header_branch
      %15 = sbr.rel (%p13) target = $region8
    $region5: #{tpu_custom_call.1} parent=1 // loop_body
      %s17 = ssub.s32 %s12, 1
      %s18 = ssub.s32 %s12, 2
      %s25 = sadd.s32 1, %s20
      %p26 = scmp.ge.s32.totalorder %s25, 2
      %s27 = scalar_select %p26, 0, %s25
      %s28 = sadd.s32 1, %s19
      %s29 = scalar_select %p26, %s28, %s19
      %p30 = scmp.ge.s32.totalorder %s29, 2
      %s31 = scalar_select %p30, 0, %s29
      %s32 = ssub.s32 %s19, %s31
      %s33 = ssub.s32 %s20, %s27
      %s34 = sor.u32 %s32, %s33
      %p35 = scmp.eq.s32.totalorder %s34, 0
      %s37 = sadd.s32 %s36, 1
      %s38 = scalar_select %p35, %s36, %s37
      %p41 = pneg %p35
      %p42 = scmp.eq.s32.totalorder %s12, 3
      %p43 = por %p41, %p42
      %p44 = scmp.ne.s32.totalorder %s36, %s39
      %p45 = scmp.eq.s32.totalorder %s12, 0
      %p46 = por %p44, %p45
      %p47 = scmp.ne.s32.totalorder %s36, %s39
      %p48 = scmp.eq.s32.totalorder %s17, 3
      %p49 = por %p47, %p48
      %p50 = scmp.ne.s32.totalorder %s39, %s40
      %p51 = scmp.eq.s32.totalorder %s17, 0
      %p52 = por %p50, %p51
      %p53 = scmp.ne.s32.totalorder %s39, %s40
      %p54 = scmp.eq.s32.totalorder %s18, 3
      %p55 = por %p53, %p54
      %p57 = scmp.ne.s32.totalorder %s40, %s56
      %p58 = scmp.eq.s32.totalorder %s18, 0
      %p59 = por %p57, %p58
      %s61 = sadd.s32 %s60, 1
      %p64 = scmp.eq.s32.totalorder %s12, 3
      %p65 = scmp.ne.s32.totalorder %s60, %s62
      %p66 = scmp.eq.s32.totalorder %s12, 0
      %p67 = por %p65, %p66
      %p68 = scmp.ne.s32.totalorder %s60, %s62
      %p69 = scmp.eq.s32.totalorder %s17, 3
      %p70 = por %p68, %p69
      %p71 = scmp.ne.s32.totalorder %s62, %s63
      %p72 = scmp.eq.s32.totalorder %s17, 0
      %p73 = por %p71, %p72
      %p74 = scmp.ne.s32.totalorder %s62, %s63
      %p75 = scmp.eq.s32.totalorder %s18, 3
      %p76 = por %p74, %p75
      %p78 = scmp.ne.s32.totalorder %s63, %s77
      %p79 = scmp.eq.s32.totalorder %s18, 0
      %p80 = por %p78, %p79
      %s82 = sadd.s32 %s81, 1
      %p85 = scmp.eq.s32.totalorder %s12, 3
      %p86 = scmp.ne.s32.totalorder %s81, %s83
      %p87 = scmp.eq.s32.totalorder %s12, 0
      %p88 = por %p86, %p87
      %p89 = scmp.ne.s32.totalorder %s81, %s83
      %p90 = scmp.eq.s32.totalorder %s17, 3
      %p91 = por %p89, %p90
      %p92 = scmp.ne.s32.totalorder %s83, %s84
      %p93 = scmp.eq.s32.totalorder %s17, 0
      %p94 = por %p92, %p93
      %p95 = scmp.ne.s32.totalorder %s83, %s84
      %p96 = scmp.eq.s32.totalorder %s18, 3
      %p97 = por %p95, %p96
      %p99 = scmp.ne.s32.totalorder %s84, %s98
      %p100 = scmp.eq.s32.totalorder %s18, 0
      %p101 = por %p99, %p100
      %s102 = ssub.s32 %s19, %s31
      %s103 = ssub.s32 %s20, %s27
      %s104 = sor.u32 %s102, %s103
      %p105 = scmp.eq.s32.totalorder %s104, 0
      %s107 = sadd.s32 %s106, 1
      %s108 = scalar_select %p105, %s106, %s107
      %p111 = pneg %p105
      %p112 = scmp.eq.s32.totalorder %s12, 3
      %p113 = por %p111, %p112
      %p114 = scmp.ne.s32.totalorder %s106, %s109
      %p115 = scmp.eq.s32.totalorder %s12, 0
      %p116 = por %p114, %p115
      %p117 = scmp.ne.s32.totalorder %s106, %s109
      %p118 = scmp.eq.s32.totalorder %s17, 3
      %p119 = por %p117, %p118
      %p120 = scmp.ne.s32.totalorder %s109, %s110
      %p121 = scmp.eq.s32.totalorder %s17, 0
      %p122 = por %p120, %p121
      %p123 = scmp.ne.s32.totalorder %s109, %s110
      %p124 = scmp.eq.s32.totalorder %s18, 3
      %p125 = por %p123, %p124
      %p127 = scmp.ne.s32.totalorder %s110, %s126
      %p128 = scmp.eq.s32.totalorder %s18, 0
      %p129 = por %p127, %p128
      %p130 = scmp.le.s32.totalorder 1, %s12
      %p131 = scmp.lt.s32.totalorder %s12, 5
      %p132 = pnand %p130, %p131
      %p133 = pneg %p132
      // Predicated region
      $region9: #{tpu_custom_call.1} parent=5 // pred_check
        _
      $region10: #{tpu_custom_call.1} parent=5 // pred_check_branch
        %135 = sbr.rel (%p132) target = $region12
      $region11: #{tpu_custom_call.1} parent=5 // pred_region
        %s136 = ssub.s32 %s12, 1
        // Predicated region
        $region13: #{tpu_custom_call.1} parent=11 // pred_check
          %p137 = pneg %p73
        $region14: #{tpu_custom_call.1} parent=11 // pred_check_branch
          %139 = sbr.rel (%p137) target = $region16
        $region15: #{tpu_custom_call.1} parent=11 // pred_region
          _
        $region16: #{tpu_custom_call.1} parent=11 // pred_fallthru
          _
        // Predicated region
        $region17: #{tpu_custom_call.1} parent=11 // pred_check
          %p140 = pneg %p94
        $region18: #{tpu_custom_call.1} parent=11 // pred_check_branch
          %142 = sbr.rel (%p140) target = $region20
        $region19: #{tpu_custom_call.1} parent=11 // pred_region
          _
        $region20: #{tpu_custom_call.1} parent=11 // pred_fallthru
          _
      $region12: #{tpu_custom_call.1} parent=5 // pred_fallthru
        _
      %p143 = scmp.lt.s32.totalorder %s12, 4
      // Predicated region
      $region21: #{tpu_custom_call.1} parent=5 // pred_check
        %p144 = pneg %p143
      $region22: #{tpu_custom_call.1} parent=5 // pred_check_branch
        %146 = sbr.rel (%p144) target = $region24
      $region23: #{tpu_custom_call.1} parent=5 // pred_region
        // Predicated region
        $region25: #{tpu_custom_call.1} parent=23 // pred_check
          %p147 = pneg %p46
        $region26: #{tpu_custom_call.1} parent=23 // pred_check_branch
          %149 = sbr.rel (%p147) target = $region28
        $region27: #{tpu_custom_call.1} parent=23 // pred_region
          %p150 = scmp.lt.s32.totalorder %s19, 1
          %s151 = scalar_select %p150, %s19, 1
          %p152 = scmp.lt.s32.totalorder %s20, 1
          %s153 = scalar_select %p152, %s20, 1
          %s154 = smul.addr %s151, 2
          %s155 = sadd.s32 %s153, %s154
          %s156 = smul.addr %s155, 4
          %s157 = scalar_lea.vmem %s0, %s156
        $region28: #{tpu_custom_call.1} parent=23 // pred_fallthru
          _
      $region24: #{tpu_custom_call.1} parent=5 // pred_fallthru
        _
      %p158 = scmp.le.s32.totalorder 1, %s12
      %p159 = scmp.lt.s32.totalorder %s12, 5
      %p160 = pnand %p158, %p159
      %p161 = pneg %p160
      // Predicated region
      $region29: #{tpu_custom_call.1} parent=5 // pred_check
        _
      $region30: #{tpu_custom_call.1} parent=5 // pred_check_branch
        %163 = sbr.rel (%p160) target = $region32
      $region31: #{tpu_custom_call.1} parent=5 // pred_region
        %s164 = ssub.s32 %s12, 1
        %p165 = scmp.lt.s32.totalorder %s21, 1
        %s166 = scalar_select %p165, %s21, 1
        %p167 = scmp.lt.s32.totalorder %s22, 1
        %s168 = scalar_select %p167, %s22, 1
        %s169 = smul.addr %s166, 2
        %s170 = sadd.s32 %s168, %s169
        %s171 = smul.addr %s170, 4
        %s172 = scalar_lea.vmem %s0, %s171
        %p173 = pneg %p52
        %p174 = pneg %p49
        %p175 = pneg %p73
        %p176 = pneg %p70
        %p177 = pneg %p94
        %p178 = pneg %p91
        %p179 = pneg %p122
        %p180 = pneg %p119
        %s181 = sand.u32 %s109, 1
        %s182 = scalar_lea.sflag [#allocation3], %s181
        %s183 = sand.u32 %s109, 1
        %s184 = smul.addr %s183, 8
        %s185 = scalar_lea.vmem [#allocation2], %s184
        %p186 = scmp.lt.s32.totalorder %s21, 1
        %s187 = scalar_select %p186, %s21, 1
        %p188 = scmp.lt.s32.totalorder %s22, 1
        %s189 = scalar_select %p188, %s22, 1
        %s190 = smul.addr %s187, 2
        %s191 = sadd.s32 %s189, %s190
        %s192 = smul.addr %s191, 4
        %s193 = scalar_lea.vmem %s0, %s192
        %v194 = vld [vmem:[%s1] sm:$0xff]
        %v195 = vld [vmem:[%s193] sm:$0xf]
        %v196 = vld [vmem:[%s2] sm:$0xff]
        %198 = vset.pattern.permute.xlu0 0
        %199 = vperm.xlu0 %198, %v196
        %v200 = vpop.permute.xlu0 %199
        %vm202 = vcmask 31744
        %v204 = vsel %vm202, %v194, 0
        %vm206 = vcmask 1043456
        %v208 = vsel %vm206, %v195, 0
        %210 = vmatprep.subr.mxu0 0.0
        %211 = vmatpush1.msra.mxu0 %v208
        %212 = vmatprep.subr.mxu0 0.0
        %213 = vmatpush1.msra.mxu0 0.0
        %214 = vmatprep.subr.mxu0 0.0
        %215 = vmatpush1.msra.mxu0 0.0
        %216 = vmatprep.subr.mxu0 0.0
        %217 = vmatpush1.msra.mxu0 0.0
        %218 = vmatprep.subr.mxu0 0.0
        %219 = vmatpush1.msra.mxu0 0.0
        %220 = vmatprep.subr.mxu0 0.0
        %221 = vmatpush1.msra.mxu0 0.0
        %222 = vmatprep.subr.mxu0 0.0
        %223 = vmatpush1.msra.mxu0 0.0
        %224 = vmatprep.subr.mxu0 0.0
        %225 = vmatpush1.msra.mxu0 0.0
        %226 = vmatprep.subr.mxu0 0.0
        %227 = vmatpush1.msra.mxu0 0.0
        %228 = vmatprep.subr.mxu0 0.0
        %229 = vmatpush1.msra.mxu0 0.0
        %230 = vmatprep.subr.mxu0 0.0
        %231 = vmatpush1.msra.mxu0 0.0
        %232 = vmatprep.subr.mxu0 0.0
        %233 = vmatpush1.msra.mxu0 0.0
        %234 = vmatprep.subr.mxu0 0.0
        %235 = vmatpush1.msra.mxu0 0.0
        %236 = vmatprep.subr.mxu0 0.0
        %237 = vmatpush1.msra.mxu0 0.0
        %238 = vmatprep.subr.mxu0 0.0
        %239 = vmatpush1.msra.mxu0 0.0
        %240 = vmatprep.subr.mxu0 0.0
        %241 = vmatpush1.msra.mxu0 0.0
        %242 = vmatprep.subr.mxu0 0.0
        %243 = vmatpush1.msra.mxu0 0.0
        %244 = vmatprep.subr.mxu0 0.0
        %245 = vmatpush1.msra.mxu0 0.0
        %246 = vmatprep.subr.mxu0 0.0
        %247 = vmatpush1.msra.mxu0 0.0
        %248 = vmatprep.subr.mxu0 0.0
        %249 = vmatpush1.msra.mxu0 0.0
        %250 = vmatprep.subr.mxu0 0.0
        %251 = vmatpush1.msra.mxu0 0.0
        %252 = vmatprep.subr.mxu0 0.0
        %253 = vmatpush1.msra.mxu0 0.0
        %254 = vmatprep.subr.mxu0 0.0
        %255 = vmatpush1.msra.mxu0 0.0
        %256 = vmatprep.subr.mxu0 0.0
        %257 = vmatpush1.msra.mxu0 0.0
        %258 = vmatprep.subr.mxu0 0.0
        %259 = vmatpush1.msra.mxu0 0.0
        %260 = vmatprep.subr.mxu0 0.0
        %261 = vmatpush1.msra.mxu0 0.0
        %262 = vmatprep.subr.mxu0 0.0
        %263 = vmatpush1.msra.mxu0 0.0
        %264 = vmatprep.subr.mxu0 0.0
        %265 = vmatpush1.msra.mxu0 0.0
        %266 = vmatprep.subr.mxu0 0.0
        %267 = vmatpush1.msra.mxu0 0.0
        %268 = vmatprep.subr.mxu0 0.0
        %269 = vmatpush1.msra.mxu0 0.0
        %270 = vmatprep.subr.mxu0 0.0
        %271 = vmatpush1.msra.mxu0 0.0
        %272 = vmatprep.subr.mxu0 0.0
        %273 = vmatpush1.msra.mxu0 0.0
        %274 = vmatprep.mubr.f32.mxu0 0.0
        %275 = vmatmul.mubr.f32.gmra.mrb[0].mxu0 %v204
        %v276 = vpop.f32.mrb[0].mxu0
        %v277 = vadd.f32 %v200, %v276
        %v278 = vpop.f32.mrb[0].mxu0
        %279 = vdwg.mxu0
        %280 = vst [vmem:[%s185] sm:$0xff] %v277
        %s281 = sand.u32 %s109, 1
        %s282 = scalar_lea.sflag [#allocation3], %s281
        %s283 = sand.u32 %s109, 1
        %s284 = smul.addr %s283, 8
        %s285 = scalar_lea.vmem [#allocation2], %s284
        // Predicated region
        $region33: #{tpu_custom_call.1} parent=31 // pred_check
          %p286 = pneg %p119
        $region34: #{tpu_custom_call.1} parent=31 // pred_check_branch
          %288 = sbr.rel (%p286) target = $region36
        $region35: #{tpu_custom_call.1} parent=31 // pred_region
          %s290 = ssub.s32 128, 128
          %291 = vsyncadd %s282, %s290
          %s292 = smul.addr %s21, 2
          %s293 = sadd.s32 %s22, %s292
          %s294 = smul.addr %s293, 128
          %s295 = scalar_lea.hbm %s3, %s294
          %s297 = sshll.u32 %s285, 4
          %s298 = int_to_ptr.vmem [resolvable:$true] %s297
          %300 = dma.vmem_to_hbm [thread:$0]  %s298, 128, %s295, %s282
        $region36: #{tpu_custom_call.1} parent=31 // pred_fallthru
          _
      $region32: #{tpu_custom_call.1} parent=5 // pred_fallthru
        _
      %p301 = scmp.le.s32.totalorder 2, %s12
      // Predicated region
      $region37: #{tpu_custom_call.1} parent=5 // pred_check
        %p302 = pneg %p301
      $region38: #{tpu_custom_call.1} parent=5 // pred_check_branch
        %304 = sbr.rel (%p302) target = $region40
      $region39: #{tpu_custom_call.1} parent=5 // pred_region
        %s305 = ssub.s32 %s12, 2
        // Predicated region
        $region41: #{tpu_custom_call.1} parent=39 // pred_check
          %p306 = pneg %p125
        $region42: #{tpu_custom_call.1} parent=39 // pred_check_branch
          %308 = sbr.rel (%p306) target = $region44
        $region43: #{tpu_custom_call.1} parent=39 // pred_region
          %s309 = sand.u32 %s110, 1
          %s310 = scalar_lea.sflag [#allocation3], %s309
          %s311 = sand.u32 %s110, 1
          %s312 = smul.addr %s311, 8
          %s313 = scalar_lea.vmem [#allocation2], %s312
          %314 = dma.done %s310, 128
        $region44: #{tpu_custom_call.1} parent=39 // pred_fallthru
          _
      $region40: #{tpu_custom_call.1} parent=5 // pred_fallthru
        _
    $region6: #{tpu_custom_call.1} parent=1 // loop_footer
      %s16 = sadd.s32 1, %s12
    $region7: #{tpu_custom_call.1} parent=1 // loop_footer_branch
      %11 = sbr.rel target = $region3
    $region8: #{tpu_custom_call.1} parent=1 // loop_exit
      _
    %315 = vsyncpa [#allocation3], 1
    %s316 = scalar_lea.sflag [#allocation3], 1
    %317 = vsyncpa %s316, 1

</llo_original>
